<compile_context>
chip_gen: v5e
topology: v5e:2x2
jax: 0.10.0
libtpu: 0.0.40
codegen_flags: <defaults>
</compile_context>

<pallas_src>
import functools

import jax
import jax.numpy as jnp
from jax.experimental import pallas as pl
from jax.experimental.pallas import tpu as pltpu


# ----------------------------------------------------------------------------
# small helpers
# ----------------------------------------------------------------------------
def _round_up(x, m):
    return (x + m - 1) // m * m


def _choose_row_tile(m, target):
    """Row tile that is a multiple of 8, close to `target`, with minimal padding."""
    n_tiles = max(1, -(-m // target))       # cdiv(m, target)
    return _round_up(-(-m // n_tiles), 8)   # cdiv(m, n_tiles) rounded to 8


# ----------------------------------------------------------------------------
# Pallas kernels
# ----------------------------------------------------------------------------
def _mm_kernel(x_ref, w_ref, o_ref):
    # (tm, K) @ (K, Nc) on the MXU; output tile stored lane-dense.
    o_ref[...] = jnp.dot(x_ref[...], w_ref[...], preferred_element_type=jnp.float32)


def _mm_bias_act_kernel(x_ref, w_ref, b_ref, o_ref, *, act):
    r = jnp.dot(x_ref[...], w_ref[...], preferred_element_type=jnp.float32) + b_ref[...]
    if act == "tanh":
        r = jnp.tanh(r)
    o_ref[...] = r


def _affine_relu_kernel(x_ref, s_ref, t_ref, o_ref):
    o_ref[...] = jnp.maximum(x_ref[...] * s_ref[...] + t_ref[...], 0.0)


# ----------------------------------------------------------------------------
# Layer 1: first transposed conv (1x1 input, k=4, s=1, p=0)  ==  matmul
# ----------------------------------------------------------------------------
def deconv_first(x_nchw, w_pt):
    """ConvTranspose2d(C_in, C_out, 4, 1, 0) on (N, C_in, 1, 1) -> NHWC (N,4,4,C_out).

    The per-channel bias is omitted: every use is followed by train-mode
    BatchNorm, whose batch-mean subtraction cancels a constant bias exactly.
    """
    N, C_in = x_nchw.shape[0], x_nchw.shape[1]
    C_out, K = w_pt.shape[1], w_pt.shape[2]
    x2 = x_nchw.reshape(N, C_in)
    # (C_in, C_out, K, K) -> (C_in, K*K*C_out), output columns ordered (ky, kx, co)
    wm = jnp.transpose(w_pt, (0, 2, 3, 1)).reshape(C_in, K * K * C_out)
    out = pl.pallas_call(
        _mm_kernel,
        out_shape=jax.ShapeDtypeStruct((N, K * K * C_out), jnp.float32),
    )(x2, wm)
    return out.reshape(N, K, K, C_out)  # NHWC


# ----------------------------------------------------------------------------
# Layer 2: strided transposed conv (k=4, s=2, p=1) via 4-phase sub-pixel matmul
# ----------------------------------------------------------------------------
def deconv_s2(x_nhwc, w_pt, b=None, act="none", m_tile_target=512):
    """ConvTranspose2d(C_in, C_out, 4, 2, 1), NHWC in -> NHWC out (spatial x2).

    Exact sub-pixel identity: output pixel (2m-1+py, 2n-1+px) is a 2x2-window
    dot product over input rows {m-1, m} / cols {n-1, n} with kernel taps
    ky = 2*(1-dy)+py, kx = 2*(1-dx)+px.  One lane-dense matmul produces all
    four phases; the wrapper pixel-shuffles and crops the invalid outer ring.

    m_tile_target: row-tile size. Sized for the ~32 MiB default scoped VMEM on
    v6e/v7x; shrink (e.g. 256) for v5e's 16 MiB default scoped VMEM.
    """
    N, H, W, C_in = x_nhwc.shape
    C_out = w_pt.shape[1]
    Hb, Wb = H + 1, W + 1

    # 2x2 window (dy, dx) of the pad-1 input folded into the channel axis.
    xp = jnp.pad(x_nhwc, ((0, 0), (1, 1), (1, 1), (0, 0)))
    patch = jnp.concatenate(
        [xp[:, dy:dy + Hb, dx:dx + Wb, :] for dy in (0, 1) for dx in (0, 1)],
        axis=-1,
    ).reshape(N * Hb * Wb, 4 * C_in)

    # (C_in, C_out, ky, kx) -> [(dy, dx, ci), (py, px, co)]
    w6 = w_pt.reshape(C_in, C_out, 2, 2, 2, 2)[:, :, ::-1, :, ::-1, :]
    w_eff = jnp.transpose(w6, (2, 4, 0, 3, 5, 1)).reshape(4 * C_in, 4 * C_out)

    M = N * Hb * Wb
    tm = _choose_row_tile(M, m_tile_target)
    Mp = _round_up(M, tm)
    if Mp != M:
        patch = jnp.pad(patch, ((0, Mp - M), (0, 0)))

    in_specs = [
        pl.BlockSpec((tm, 4 * C_in), lambda i: (i, 0)),            # streamed M tiles
        pl.BlockSpec((4 * C_in, 4 * C_out), lambda i: (0, 0)),     # resident weights
    ]
    args = [patch, w_eff]
    if b is not None:
        in_specs.append(pl.BlockSpec((1, 4 * C_out), lambda i: (0, 0)))
        args.append(jnp.tile(b, 4).reshape(1, 4 * C_out))
        kernel = functools.partial(_mm_bias_act_kernel, act=act)
    else:
        kernel = _mm_kernel

    out = pl.pallas_call(
        kernel,
        out_shape=jax.ShapeDtypeStruct((Mp, 4 * C_out), jnp.float32),
        grid=(Mp // tm,),
        in_specs=in_specs,
        out_specs=pl.BlockSpec((tm, 4 * C_out), lambda i: (i, 0)),
        compiler_params=pltpu.CompilerParams(dimension_semantics=("parallel",)),
    )(*args)

    # pixel-shuffle the 4 phases, then crop the invalid outermost ring.
    out = out[:M].reshape(N, Hb, Wb, 2, 2, C_out)
    out = jnp.transpose(out, (0, 1, 3, 2, 4, 5)).reshape(N, 2 * Hb, 2 * Wb, C_out)
    return out[:, 1:2 * H + 1, 1:2 * W + 1, :]


# ----------------------------------------------------------------------------
# Layer 3: BatchNorm (training-mode batch stats) + ReLU, lane-dense fused apply
# ----------------------------------------------------------------------------
def batchnorm_relu(x_nhwc, gamma, beta, eps=1e-5):
    N, H, W, C = x_nhwc.shape
    M = N * H * W
    x2 = x_nhwc.reshape(M, C)

    # train-mode batch stats (biased variance) in one fused reduction pass
    mean = jnp.mean(x2, axis=0)
    mean_sq = jnp.mean(jnp.square(x2), axis=0)
    var = mean_sq - jnp.square(mean)
    scale = gamma * jax.lax.rsqrt(var + eps)
    shift = beta - mean * scale

    # fold rows into lanes so the store width is a multiple of 128 (lane-dense)
    F = max(1, 128 // C)
    if M % F != 0:
        F = 1
    rows, width = M // F, F * C
    xr = x2.reshape(rows, width)
    s = jnp.tile(scale, F).reshape(1, width)
    t = jnp.tile(shift, F).reshape(1, width)

    tr = _choose_row_tile(rows, 1024)
    rows_p = _round_up(rows, tr)
    if rows_p != rows:
        xr = jnp.pad(xr, ((0, rows_p - rows), (0, 0)))

    out = pl.pallas_call(
        _affine_relu_kernel,
        out_shape=jax.ShapeDtypeStruct((rows_p, width), jnp.float32),
        grid=(rows_p // tr,),
        in_specs=[
            pl.BlockSpec((tr, width), lambda i: (i, 0)),
            pl.BlockSpec((1, width), lambda i: (0, 0)),
            pl.BlockSpec((1, width), lambda i: (0, 0)),
        ],
        out_specs=pl.BlockSpec((tr, width), lambda i: (i, 0)),
        compiler_params=pltpu.CompilerParams(dimension_semantics=("parallel",)),
    )(xr, s, t)
    return out[:rows].reshape(N, H, W, C)


# ----------------------------------------------------------------------------
# Generator forward (matches the PyTorch module semantics, training-mode BN)
# ----------------------------------------------------------------------------
def generator_forward(params, x, y):
    # x: (N, nz, 1, 1), y: (N, ncls, 1, 1)  -- NCHW like PyTorch
    h_x = deconv_first(x, params["dc1_x_w"])                              # (N,4,4,4*ngf)
    h_x = batchnorm_relu(h_x, params["bn1_x_g"], params["bn1_x_b"])
    h_y = deconv_first(y, params["dc1_y_w"])                              # (N,4,4,4*ngf)
    h_y = batchnorm_relu(h_y, params["bn1_y_g"], params["bn1_y_b"])
    h = jnp.concatenate([h_x, h_y], axis=-1)                              # (N,4,4,8*ngf)

    h = deconv_s2(h, params["dc2_w"])                                     # (N,8,8,4*ngf)
    h = batchnorm_relu(h, params["bn2_g"], params["bn2_b"])
    h = deconv_s2(h, params["dc3_w"])                                     # (N,16,16,2*ngf)
    h = batchnorm_relu(h, params["bn3_g"], params["bn3_b"])
    h = deconv_s2(h, params["dc4_w"])                                     # (N,32,32,ngf)
    h = batchnorm_relu(h, params["bn4_g"], params["bn4_b"])
    out = deconv_s2(h, params["dc5_w"], b=params["dc5_b"], act="tanh")    # (N,64,64,nch)

    return jnp.transpose(out, (0, 3, 1, 2))                               # back to NCHW


# ----------------------------------------------------------------------------
# Deterministic parameter init (normal_init(mean=0, std=0.02); BN gamma=1, beta=0)
# Note: dc1..dc4 biases are kept for interface parity but are mathematically
# cancelled by the following train-mode BatchNorm (PyTorch zero-inits them).
# ----------------------------------------------------------------------------
def init_params(key, nz, ngf, nch, ncls, std=0.02):
    ks = jax.random.split(key, 6)

    def wconv(k, cin, cout):
        return jax.random.normal(k, (cin, cout, 4, 4), jnp.float32) * std

    z = lambda c: jnp.zeros((c,), jnp.float32)
    o = lambda c: jnp.ones((c,), jnp.float32)
    return {
        "dc1_x_w": wconv(ks[0], nz, ngf * 4), "dc1_x_b": z(ngf * 4),
        "bn1_x_g": o(ngf * 4), "bn1_x_b": z(ngf * 4),
        "dc1_y_w": wconv(ks[1], ncls, ngf * 4), "dc1_y_b": z(ngf * 4),
        "bn1_y_g": o(ngf * 4), "bn1_y_b": z(ngf * 4),
        "dc2_w": wconv(ks[2], ngf * 8, ngf * 4), "dc2_b": z(ngf * 4),
        "bn2_g": o(ngf * 4), "bn2_b": z(ngf * 4),
        "dc3_w": wconv(ks[3], ngf * 4, ngf * 2), "dc3_b": z(ngf * 2),
        "bn3_g": o(ngf * 2), "bn3_b": z(ngf * 2),
        "dc4_w": wconv(ks[4], ngf * 2, ngf), "dc4_b": z(ngf),
        "bn4_g": o(ngf), "bn4_b": z(ngf),
        "dc5_w": wconv(ks[5], ngf, nch), "dc5_b": z(nch),
    }


if __name__ == "__main__":
    nz, ngf, nch, ncls, N = 16, 8, 3, 8, 2

    key = jax.random.PRNGKey(0)
    k_params, k_x, k_chk = jax.random.split(key, 3)
    params = init_params(k_params, nz, ngf, nch, ncls)

    x = jax.random.normal(k_x, (N, nz, 1, 1), jnp.float32)
    y = jax.nn.one_hot(jnp.arange(N) % ncls, ncls, dtype=jnp.float32).reshape(
        N, ncls, 1, 1
    )

    # sanity: Pallas 4-phase deconv == XLA transposed conv (dilated-conv form)
    xt = jax.random.normal(k_chk, (2, 5, 5, 8), jnp.float32)
    wt = jax.random.normal(jax.random.PRNGKey(1), (8, 6, 4, 4), jnp.float32) * 0.05
    bt = jax.random.normal(jax.random.PRNGKey(2), (6,), jnp.float32) * 0.05
    got = deconv_s2(xt, wt, b=bt)
    ref = jax.lax.conv_general_dilated(
        xt, jnp.transpose(wt[:, :, ::-1, ::-1], (2, 3, 0, 1)),
        window_strides=(1, 1), padding=[(2, 2), (2, 2)], lhs_dilation=(2, 2),
        dimension_numbers=("NHWC", "HWIO", "NHWC")) + bt
    assert got.shape == ref.shape == (2, 10, 10, 6), (got.shape, ref.shape)
    assert bool(jnp.max(jnp.abs(got - ref)) < 1e-3), float(jnp.max(jnp.abs(got - ref)))

    out = jax.jit(generator_forward)(params, x, y)
    out = jax.block_until_ready(out)

    assert out.shape == (N, nch, 64, 64), out.shape
    assert bool(jnp.all(jnp.isfinite(out)))
    assert bool(jnp.all(jnp.abs(out) <= 1.0))  # tanh range
    print("KERNEL_OK")
</pallas_src>

<mosaic_0001>
module attributes {stable_mosaic.version = 11 : i64} {
  func.func @_mm_bias_act_kernel(%arg0: i32, %arg1: memref<72x32xf32, #tpu.memory_space<vmem>>, %arg2: memref<32x24xf32, #tpu.memory_space<vmem>>, %arg3: memref<1x24xf32, #tpu.memory_space<vmem>>, %arg4: memref<72x24xf32, #tpu.memory_space<vmem>>) attributes {dimension_semantics = [#tpu.dimension_semantics<parallel>], iteration_bounds = array<i64: 1>, scalar_prefetch = 0 : i64, scratch_operands = 0 : i64, tpu.core_type = #tpu.core_type<tc>, window_params = [{transform_indices = @transform_0, window_bounds = array<i64: 72, 32>}, {pipeline_mode = #tpu.pipeline_mode<synchronous>, transform_indices = @transform_1, window_bounds = array<i64: 32, 24>}, {pipeline_mode = #tpu.pipeline_mode<synchronous>, transform_indices = @transform_2, window_bounds = array<i64: 1, 24>}, {transform_indices = @transform_3, window_bounds = array<i64: 72, 24>}]} {
    %c0 = arith.constant 0 : index
    %c0_0 = arith.constant 0 : index
    %0 = vector.load %arg1[%c0, %c0_0] : memref<72x32xf32, #tpu.memory_space<vmem>>, vector<72x32xf32>
    %c0_1 = arith.constant 0 : index
    %c0_2 = arith.constant 0 : index
    %1 = vector.load %arg2[%c0_1, %c0_2] : memref<32x24xf32, #tpu.memory_space<vmem>>, vector<32x24xf32>
    %cst = arith.constant dense<0.000000e+00> : vector<72x24xf32>
    %2 = tpu.matmul %0, %1, %cst {dimension_numbers = #tpu.dot_dimension_numbers<[1], [0], [0], [1], [0, 0, 1, 1], [], []>} : vector<72x32xf32>, vector<32x24xf32>, vector<72x24xf32> -> vector<72x24xf32>
    %c0_3 = arith.constant 0 : index
    %c0_4 = arith.constant 0 : index
    %3 = vector.load %arg3[%c0_3, %c0_4] : memref<1x24xf32, #tpu.memory_space<vmem>>, vector<1x24xf32>
    %4 = vector.broadcast %3 : vector<1x24xf32> to vector<72x24xf32>
    %5 = arith.addf %2, %4 : vector<72x24xf32>
    %c0_5 = arith.constant 0 : index
    %c0_6 = arith.constant 0 : index
    %6 = vector.load %arg4[%c0_5, %c0_6] : memref<72x24xf32, #tpu.memory_space<vmem>>, vector<72x24xf32>
    tpu.vector_store %arg4[%c0_5, %c0_6], %5 {strides = array<i32>} : memref<72x24xf32, #tpu.memory_space<vmem>>, vector<72x24xf32>,
    return
  }
  func.func @transform_0(%arg0: i32) -> (i32, i32) {
    %c0_i32 = arith.constant 0 : i32
    %c0_i32_0 = arith.constant 0 : i32
    return %arg0, %c0_i32 : i32, i32
  }
  func.func @transform_1(%arg0: i32) -> (i32, i32) {
    %c0_i32 = arith.constant 0 : i32
    %c0_i32_0 = arith.constant 0 : i32
    %c0_i32_1 = arith.constant 0 : i32
    return %c0_i32, %c0_i32_0 : i32, i32
  }
  func.func @transform_2(%arg0: i32) -> (i32, i32) {
    %c0_i32 = arith.constant 0 : i32
    %c0_i32_0 = arith.constant 0 : i32
    %c0_i32_1 = arith.constant 0 : i32
    return %c0_i32, %c0_i32_0 : i32, i32
  }
  func.func @transform_3(%arg0: i32) -> (i32, i32) {
    %c0_i32 = arith.constant 0 : i32
    %c0_i32_0 = arith.constant 0 : i32
    return %arg0, %c0_i32 : i32, i32
  }
}

</mosaic_0001>

<llo_original>
// kernel: tpu_custom_call.1
$region0: #{tpu_custom_call.1}
  #allocation0 [shape = 'u32[]', space=smem, size = 0x4, offset = 0x4, fixed_abs, tag = 'smem constant byte address 0x4 - core index']
  #allocation1 [shape = 'u32[72,128]{1,0:T(1,128)}', space=vmem, size = 0x9000, scoped, tag = 'internal scratch']
  %s0 = inlined_call_operand.vmem [shape: f32[72,32], index: 0, kind: input, shape index: {}]
  %s1 = inlined_call_operand.vmem [shape: f32[32,24], index: 1, kind: input, shape index: {}]
  %s2 = inlined_call_operand.vmem [shape: f32[1,24], index: 2, kind: input, shape index: {}]
  %s3 = inlined_call_operand.vmem [shape: f32[72,24], index: 3, kind: output, shape index: {}]
  %s4 = sld [smem:[#allocation0]]
  $region22: #{tpu_custom_call.1} parent=0
    _
  %s6 = ssub.s32 1, %s4
  %s7 = scalar_select 0, %s6, %s4
  // Predicated region
  $region2: #{tpu_custom_call.1} parent=0 // pred_check
    _
  $region3: #{tpu_custom_call.1} parent=0 // pred_check_branch
    %9 = sbr.rel (0) target = $region5
  $region4: #{tpu_custom_call.1} parent=0 // pred_region
    _
  $region5: #{tpu_custom_call.1} parent=0 // pred_fallthru
    _
  // Predicated region
  $region6: #{tpu_custom_call.1} parent=0 // pred_check
    _
  $region7: #{tpu_custom_call.1} parent=0 // pred_check_branch
    %11 = sbr.rel (0) target = $region9
  $region8: #{tpu_custom_call.1} parent=0 // pred_region
    _
  $region9: #{tpu_custom_call.1} parent=0 // pred_fallthru
    _
  // Predicated region
  $region10: #{tpu_custom_call.1} parent=0 // pred_check
    _
  $region11: #{tpu_custom_call.1} parent=0 // pred_check_branch
    %13 = sbr.rel (0) target = $region13
  $region12: #{tpu_custom_call.1} parent=0 // pred_region
    _
  $region13: #{tpu_custom_call.1} parent=0 // pred_fallthru
    _
  %v14 = vld [vmem:[%s0] sm:$0xff]
  %v15 = vld [vmem:[%s0 + $0x8] sm:$0xff]
  %v16 = vld [vmem:[%s0 + $0x10] sm:$0xff]
  %v17 = vld [vmem:[%s0 + $0x18] sm:$0xff]
  %v18 = vld [vmem:[%s0 + $0x20] sm:$0xff]
  %v19 = vld [vmem:[%s0 + $0x28] sm:$0xff]
  %v20 = vld [vmem:[%s0 + $0x30] sm:$0xff]
  %v21 = vld [vmem:[%s0 + $0x38] sm:$0xff]
  %v22 = vld [vmem:[%s0 + $0x40] sm:$0xff]
  %v23 = vld [vmem:[%s1] sm:$0xff]
  %v24 = vld [vmem:[%s1 + $0x8] sm:$0xff]
  %v25 = vld [vmem:[%s1 + $0x10] sm:$0xff]
  %v26 = vld [vmem:[%s1 + $0x18] sm:$0xff]
  %v27 = vld [vmem:[%s2] sm:$0x1]
  %v29 = vperm.slane %v27, 0
  %vm31 = vcmask 261120
  %v33 = vsel %vm31, %v14, 0
  %v36 = vsel %vm31, %v15, 0
  %v39 = vsel %vm31, %v16, 0
  %v42 = vsel %vm31, %v17, 0
  %v45 = vsel %vm31, %v18, 0
  %v48 = vsel %vm31, %v19, 0
  %v51 = vsel %vm31, %v20, 0
  %v54 = vsel %vm31, %v21, 0
  %v57 = vsel %vm31, %v22, 0
  %59 = vmatpush.msra.mxu0 0.0
  %60 = vmatpush.msra.mxu0 0.0
  %61 = vmatpush.msra.mxu0 0.0
  %62 = vmatpush.msra.mxu0 0.0
  %63 = vmatpush.msra.mxu0 0.0
  %64 = vmatpush.msra.mxu0 0.0
  %65 = vmatpush.msra.mxu0 0.0
  %66 = vmatpush.msra.mxu0 0.0
  %67 = vmatpush.msra.mxu0 0.0
  %68 = vmatpush.msra.mxu0 0.0
  %69 = vmatpush.msra.mxu0 0.0
  %70 = vmatpush.msra.mxu0 0.0
  %71 = vmatpush.msra.mxu0 %v26
  %72 = vmatpush.msra.mxu0 %v25
  %73 = vmatpush.msra.mxu0 %v24
  %74 = vmatpush.msra.mxu0 %v23
  %75 = vmatmul.f32.gmra.mxu0 %v33
  %v76 = vpop.f32.mrf.mxu0
  %v77 = vadd.f32 %v29, %v76
  %78 = vmatmul.f32.gmra.mxu0 %v36
  %v79 = vpop.f32.mrf.mxu0
  %v80 = vadd.f32 %v29, %v79
  %81 = vmatmul.f32.gmra.mxu0 %v39
  %v82 = vpop.f32.mrf.mxu0
  %v83 = vadd.f32 %v29, %v82
  %84 = vmatmul.f32.gmra.mxu0 %v42
  %v85 = vpop.f32.mrf.mxu0
  %v86 = vadd.f32 %v29, %v85
  %87 = vmatmul.f32.gmra.mxu0 %v45
  %v88 = vpop.f32.mrf.mxu0
  %v89 = vadd.f32 %v29, %v88
  %90 = vmatmul.f32.gmra.mxu0 %v48
  %v91 = vpop.f32.mrf.mxu0
  %v92 = vadd.f32 %v29, %v91
  %93 = vmatmul.f32.gmra.mxu0 %v51
  %v94 = vpop.f32.mrf.mxu0
  %v95 = vadd.f32 %v29, %v94
  %96 = vmatmul.f32.gmra.mxu0 %v54
  %v97 = vpop.f32.mrf.mxu0
  %v98 = vadd.f32 %v29, %v97
  %99 = vmatmul.f32.gmra.mxu0 %v57
  %v100 = vpop.f32.mrf.mxu0
  %v101 = vadd.f32 %v29, %v100
  %102 = vdwg.mxu0
  %vm103 = vcmask 195584
  %104 = vst.msk [vmem:[%s3] sm:$0xff] %vm103, %v77
  %105 = vst.msk [vmem:[%s3 + $0x8] sm:$0xff] %vm103, %v80
  %106 = vst.msk [vmem:[%s3 + $0x10] sm:$0xff] %vm103, %v83
  %107 = vst.msk [vmem:[%s3 + $0x18] sm:$0xff] %vm103, %v86
  %108 = vst.msk [vmem:[%s3 + $0x20] sm:$0xff] %vm103, %v89
  %109 = vst.msk [vmem:[%s3 + $0x28] sm:$0xff] %vm103, %v92
  %110 = vst.msk [vmem:[%s3 + $0x30] sm:$0xff] %vm103, %v95
  %111 = vst.msk [vmem:[%s3 + $0x38] sm:$0xff] %vm103, %v98
  %112 = vst.msk [vmem:[%s3 + $0x40] sm:$0xff] %vm103, %v101
  // Predicated region
  $region14: #{tpu_custom_call.1} parent=0 // pred_check
    _
  $region15: #{tpu_custom_call.1} parent=0 // pred_check_branch
    %114 = sbr.rel (0) target = $region17
  $region16: #{tpu_custom_call.1} parent=0 // pred_region
    _
  $region17: #{tpu_custom_call.1} parent=0 // pred_fallthru
    _
  // Predicated region
  $region18: #{tpu_custom_call.1} parent=0 // pred_check
    _
  $region19: #{tpu_custom_call.1} parent=0 // pred_check_branch
    %116 = sbr.rel (0) target = $region21
  $region20: #{tpu_custom_call.1} parent=0 // pred_region
    _
  $region21: #{tpu_custom_call.1} parent=0 // pred_fallthru
    _

</llo_original>
